<compile_context>
chip_gen: v7x
topology: tpu7x:2x2x1
jax: 0.10.0
libtpu: 0.0.40
codegen_flags: <defaults>
</compile_context>

<pallas_src>
import functools
import math

import jax
import jax.numpy as jnp
from jax import lax
from jax.experimental import pallas as pl
from jax.experimental.pallas import tpu as pltpu


def _attn_kernel(q_ref, k_ref, v_ref, mask_ref, o_ref, *, scale, use_bf16):
    # q_ref: (TQ, D)   k_ref / v_ref: (S, D)   mask_ref: (TQ, S)   o_ref: (TQ, D)
    q = q_ref[...] * scale               # fold 1/sqrt(D) into q: O(TQ*D) VPU work
    k = k_ref[...]                       # (S, D)
    v = v_ref[...]                       # (S, D)
    m = mask_ref[...].astype(jnp.float32)  # mask may arrive compressed (bf16)

    if use_bf16:
        q = q.astype(jnp.bfloat16)
        k = k.astype(jnp.bfloat16)
        v = v.astype(jnp.bfloat16)

    # q @ k^T without an explicit transpose: contract last dim of both (NT).
    qk = lax.dot_general(
        q, k,
        dimension_numbers=(((1,), (1,)), ((), ())),
        preferred_element_type=jnp.float32,
    ) + m                                                    # (TQ, S)

    # Numerically-stable softmax with deferred normalization.
    qk_max = jnp.max(qk, axis=-1, keepdims=True)             # (TQ, 1)
    p = jnp.exp(qk - qk_max)                                 # (TQ, S)
    denom = jnp.sum(p, axis=-1, keepdims=True)               # (TQ, 1)

    # p @ v first; divide the small (TQ, D) result instead of the (TQ, S) tile.
    p_mm = p.astype(jnp.bfloat16) if use_bf16 else p
    out = jnp.dot(p_mm, v, preferred_element_type=jnp.float32)   # (TQ, D)

    # Per-row reciprocal on the EUP slot; exact on the precise (f32) path.
    inv = pl.reciprocal(denom, approx=use_bf16)
    o_ref[...] = (out * inv).astype(o_ref.dtype)


def _vmem_block_bytes(tq, S, D, mask_itemsize, io_itemsize=4):
    # Double-buffered pipelined blocks + f32 qk/p intermediates.
    blocks = 2 * (tq * D * io_itemsize        # q
                  + 2 * S * D * io_itemsize   # k + v (full seq)
                  + tq * S * mask_itemsize    # mask
                  + tq * D * io_itemsize)     # out
    scratch = 2 * tq * S * 4                  # qk and p (f32)
    return blocks + scratch


def _pick_tq(B, S, D, mask_itemsize, vmem_budget=40 * 1024 * 1024):
    """Largest query tile dividing S that fits the VMEM budget; prefer an even
    total grid-step count (two v7x TensorCores) without shrinking below TQ/2."""
    cands = [c for c in (512, 256, 128, 64) if S % c == 0] or [S]
    fitting = [c for c in cands
               if _vmem_block_bytes(c, S, D, mask_itemsize) <= vmem_budget]
    if not fitting:
        fitting = [min(cands)]
    tq = fitting[0]                       # candidates are descending -> largest
    if (B * (S // tq)) % 2 != 0:
        for c in fitting:
            if c >= tq // 2 and (B * (S // c)) % 2 == 0:
                tq = c
                break
    return tq


def attention(q, k, v2, mask, *, use_bf16=False, compress_mask=True):
    B, S, D = q.shape
    assert k.shape == (B, S, D) and v2.shape == (B, S, D)
    assert mask.shape == (B, S, S)

    # The additive mask only needs to send masked logits to -inf; bf16
    # represents {0, -1e9} faithfully enough and it is the lone O(S^2) HBM
    # stream, so compress it to halve the dominant DMA / VMEM tile.
    if compress_mask:
        mask = mask.astype(jnp.bfloat16)
    mask_itemsize = jnp.dtype(mask.dtype).itemsize
    io_itemsize = jnp.dtype(q.dtype).itemsize

    TQ = _pick_tq(B, S, D, mask_itemsize)
    n_q_tiles = S // TQ

    footprint = _vmem_block_bytes(TQ, S, D, mask_itemsize, io_itemsize)
    vmem_limit = int(min(64 << 20, max(32 << 20, footprint * 3 // 2 + (2 << 20))))

    grid_spec = pltpu.PrefetchScalarGridSpec(
        num_scalar_prefetch=0,
        grid=(B, n_q_tiles),
        in_specs=[
            pl.BlockSpec((pl.Squeezed(), TQ, D), lambda b, i: (b, i, 0)),  # q
            pl.BlockSpec((pl.Squeezed(), S, D), lambda b, i: (b, 0, 0)),   # k
            pl.BlockSpec((pl.Squeezed(), S, D), lambda b, i: (b, 0, 0)),   # v2
            pl.BlockSpec((pl.Squeezed(), TQ, S), lambda b, i: (b, i, 0)),  # mask
        ],
        out_specs=pl.BlockSpec((pl.Squeezed(), TQ, D), lambda b, i: (b, i, 0)),
    )

    cost = pl.CostEstimate(
        flops=4 * B * S * S * D,                       # two matmuls, 2*S*S*D each
        transcendentals=B * S * S,                     # exp over the score matrix
        bytes_accessed=4 * B * S * D * io_itemsize     # q, k, v2, out
                       + B * S * S * mask_itemsize,    # (possibly compressed) mask
    )

    kernel = functools.partial(
        _attn_kernel, scale=1.0 / math.sqrt(D), use_bf16=use_bf16)

    return pl.pallas_call(
        kernel,
        out_shape=jax.ShapeDtypeStruct((B, S, D), q.dtype),
        grid_spec=grid_spec,
        compiler_params=pltpu.CompilerParams(
            dimension_semantics=("parallel", "parallel"),
            vmem_limit_bytes=vmem_limit,
        ),
        cost_estimate=cost,
    )(q, k, v2, mask)


def attention_ref(q, k, v2, mask):
    qk = jnp.einsum("bsd,btd->bst", q, k) / math.sqrt(q.shape[-1])
    qk = qk + mask
    attn = jax.nn.softmax(qk, axis=-1)
    return jnp.einsum("bst,btd->bsd", attn, v2)


if __name__ == "__main__":
    # Shapes consistent with the module's (3, 128, 128) mask.
    B, S, D = 3, 128, 128

    key = jax.random.PRNGKey(0)
    kq, kk, kv, km = jax.random.split(key, 4)

    q = jax.random.normal(kq, (B, S, D), dtype=jnp.float32)
    k = jax.random.normal(kk, (B, S, D), dtype=jnp.float32)
    v2 = jax.random.normal(kv, (B, S, D), dtype=jnp.float32)
    # Deterministic additive mask (positions where rand > 0.7 get -1e9, else 0),
    # mirroring the module-level mask construction used as the forward input.
    mask = jnp.where(
        jax.random.uniform(km, (B, S, S)) > 0.7, -1.0e9, 0.0
    ).astype(jnp.float32)

    ref = attention_ref(q, k, v2, mask)

    # Precise path: f32 MXU operands, matches the f32 reference to 1e-4.
    out = jax.block_until_ready(attention(q, k, v2, mask))
    assert out.shape == (B, S, D)
    assert jnp.allclose(out, ref, atol=1e-4, rtol=1e-4), "precise path mismatch"

    # Fast path: bf16 MXU operands with f32 accumulation (looser tolerance).
    out_fast = jax.block_until_ready(attention(q, k, v2, mask, use_bf16=True))
    assert out_fast.shape == (B, S, D)
    assert jnp.allclose(out_fast, ref, atol=3e-2, rtol=3e-2), "bf16 path mismatch"

    print("KERNEL_OK")
</pallas_src>

<mosaic_0001>
module attributes {stable_mosaic.version = 11 : i64} {
  func.func @_attn_kernel(%arg0: i32, %arg1: i32, %arg2: memref<1x64x128xf32, #tpu.memory_space<vmem>>, %arg3: memref<1x128x128xf32, #tpu.memory_space<vmem>>, %arg4: memref<1x128x128xf32, #tpu.memory_space<vmem>>, %arg5: memref<1x64x128xbf16, #tpu.memory_space<vmem>>, %arg6: memref<1x64x128xf32, #tpu.memory_space<vmem>>) attributes {dimension_semantics = [#tpu.dimension_semantics<parallel>, #tpu.dimension_semantics<parallel>], iteration_bounds = array<i64: 3, 2>, scalar_prefetch = 0 : i64, scratch_operands = 0 : i64, tpu.core_type = #tpu.core_type<tc>, window_params = [{transform_indices = @transform_0, window_bounds = array<i64: 1, 64, 128>}, {transform_indices = @transform_1, window_bounds = array<i64: 1, 128, 128>}, {transform_indices = @transform_2, window_bounds = array<i64: 1, 128, 128>}, {transform_indices = @transform_3, window_bounds = array<i64: 1, 64, 128>}, {transform_indices = @transform_4, window_bounds = array<i64: 1, 64, 128>}]} {
    %c0 = arith.constant 0 : index
    %c0_0 = arith.constant 0 : index
    %c0_1 = arith.constant 0 : index
    %0 = vector.load %arg2[%c0, %c0_0, %c0_1] : memref<1x64x128xf32, #tpu.memory_space<vmem>>, vector<1x64x128xf32>
    %1 = vector.shape_cast %0 : vector<1x64x128xf32> to vector<64x128xf32>
    %cst = arith.constant 0.0883883461 : f32
    %2 = vector.broadcast %cst : f32 to vector<64x128xf32>
    %3 = arith.mulf %1, %2 : vector<64x128xf32>
    %c0_2 = arith.constant 0 : index
    %c0_3 = arith.constant 0 : index
    %c0_4 = arith.constant 0 : index
    %4 = vector.load %arg3[%c0_2, %c0_3, %c0_4] : memref<1x128x128xf32, #tpu.memory_space<vmem>>, vector<1x128x128xf32>
    %5 = vector.shape_cast %4 : vector<1x128x128xf32> to vector<128x128xf32>
    %c0_5 = arith.constant 0 : index
    %c0_6 = arith.constant 0 : index
    %c0_7 = arith.constant 0 : index
    %6 = vector.load %arg4[%c0_5, %c0_6, %c0_7] : memref<1x128x128xf32, #tpu.memory_space<vmem>>, vector<1x128x128xf32>
    %7 = vector.shape_cast %6 : vector<1x128x128xf32> to vector<128x128xf32>
    %c0_8 = arith.constant 0 : index
    %c0_9 = arith.constant 0 : index
    %c0_10 = arith.constant 0 : index
    %8 = vector.load %arg5[%c0_8, %c0_9, %c0_10] : memref<1x64x128xbf16, #tpu.memory_space<vmem>>, vector<1x64x128xbf16>
    %9 = vector.shape_cast %8 : vector<1x64x128xbf16> to vector<64x128xbf16>
    %10 = arith.extf %9 : vector<64x128xbf16> to vector<64x128xf32>
    %cst_11 = arith.constant dense<0.000000e+00> : vector<64x128xf32>
    %11 = tpu.matmul %3, %5, %cst_11 {dimension_numbers = #tpu.dot_dimension_numbers<[1], [1], [0], [0], [0, 0, 1, 0], [], []>} : vector<64x128xf32>, vector<128x128xf32>, vector<64x128xf32> -> vector<64x128xf32>
    %12 = arith.addf %11, %10 : vector<64x128xf32>
    %cst_12 = arith.constant dense<0xFF800000> : vector<64xf32>
    %13 = vector.multi_reduction <maximumf>, %12, %cst_12 [1] : vector<64x128xf32> to vector<64xf32>
    %14 = vector.shape_cast %13 : vector<64xf32> to vector<64x1xf32>
    %15 = vector.broadcast %14 : vector<64x1xf32> to vector<64x128xf32>
    %16 = arith.subf %12, %15 : vector<64x128xf32>
    %17 = math.exp %16 : vector<64x128xf32>
    %cst_13 = arith.constant dense<0.000000e+00> : vector<64xf32>
    %18 = vector.multi_reduction <add>, %17, %cst_13 [1] : vector<64x128xf32> to vector<64xf32>
    %19 = vector.shape_cast %18 : vector<64xf32> to vector<64x1xf32>
    %cst_14 = arith.constant dense<0.000000e+00> : vector<64x128xf32>
    %20 = tpu.matmul %17, %7, %cst_14 {dimension_numbers = #tpu.dot_dimension_numbers<[1], [0], [0], [1], [0, 0, 1, 1], [], []>} : vector<64x128xf32>, vector<128x128xf32>, vector<64x128xf32> -> vector<64x128xf32>
    %21 = tpu.reciprocal %19 : vector<64x1xf32> -> vector<64x1xf32>
    %22 = vector.broadcast %21 : vector<64x1xf32> to vector<64x128xf32>
    %23 = arith.mulf %20, %22 : vector<64x128xf32>
    %c0_15 = arith.constant 0 : index
    %c0_16 = arith.constant 0 : index
    %c0_17 = arith.constant 0 : index
    %24 = vector.load %arg6[%c0_15, %c0_16, %c0_17] : memref<1x64x128xf32, #tpu.memory_space<vmem>>, vector<1x64x128xf32>
    %25 = vector.shape_cast %24 : vector<1x64x128xf32> to vector<64x128xf32>
    %26 = vector.shape_cast %23 : vector<64x128xf32> to vector<1x64x128xf32>
    tpu.vector_store %arg6[%c0_15, %c0_16, %c0_17], %26 {strides = array<i32>} : memref<1x64x128xf32, #tpu.memory_space<vmem>>, vector<1x64x128xf32>,
    return
  }
  func.func @transform_0(%arg0: i32, %arg1: i32) -> (i32, i32, i32) {
    %c0_i32 = arith.constant 0 : i32
    %c0_i32_0 = arith.constant 0 : i32
    return %arg0, %arg1, %c0_i32 : i32, i32, i32
  }
  func.func @transform_1(%arg0: i32, %arg1: i32) -> (i32, i32, i32) {
    %c0_i32 = arith.constant 0 : i32
    %c0_i32_0 = arith.constant 0 : i32
    %c0_i32_1 = arith.constant 0 : i32
    return %arg0, %c0_i32, %c0_i32_0 : i32, i32, i32
  }
  func.func @transform_2(%arg0: i32, %arg1: i32) -> (i32, i32, i32) {
    %c0_i32 = arith.constant 0 : i32
    %c0_i32_0 = arith.constant 0 : i32
    %c0_i32_1 = arith.constant 0 : i32
    return %arg0, %c0_i32, %c0_i32_0 : i32, i32, i32
  }
  func.func @transform_3(%arg0: i32, %arg1: i32) -> (i32, i32, i32) {
    %c0_i32 = arith.constant 0 : i32
    %c0_i32_0 = arith.constant 0 : i32
    return %arg0, %arg1, %c0_i32 : i32, i32, i32
  }
  func.func @transform_4(%arg0: i32, %arg1: i32) -> (i32, i32, i32) {
    %c0_i32 = arith.constant 0 : i32
    %c0_i32_0 = arith.constant 0 : i32
    return %arg0, %arg1, %c0_i32 : i32, i32, i32
  }
}

</mosaic_0001>

<llo_original>
// kernel: tpu_custom_call.1
$region0: #{tpu_custom_call.1}
  #allocation0 [shape = 'u32[]', space=smem, size = 0x4, offset = 0x4, fixed_abs, tag = 'smem constant byte address 0x4 - core index']
  #allocation1 [shape = 'u32[144,128]{1,0:T(1,128)}', space=vmem, size = 0x12000, scoped, tag = 'internal scratch']
  %s0 = inlined_call_operand.hbm [shape: f32[3,128,128], index: 0, kind: input, shape index: {}]
  %s1 = inlined_call_operand.hbm [shape: f32[3,128,128], index: 1, kind: input, shape index: {}]
  %s2 = inlined_call_operand.hbm [shape: f32[3,128,128], index: 2, kind: input, shape index: {}]
  %s3 = inlined_call_operand.hbm [shape: bf16[3,128,128], index: 3, kind: input, shape index: {}]
  %s4 = inlined_call_operand.hbm [shape: f32[3,128,128], index: 4, kind: output, shape index: {}]
  %s5 = sld [smem:[#allocation0]]
  $region65: #{tpu_custom_call.1} parent=0
    _
  %s7 = ssub.s32 1, %s5
  %s8 = scalar_select 0, %s7, %s5
  $region1: #{tpu_custom_call.1} parent=0
    #allocation2 [shape = 'u8[65536]{0}', space=vmem, size = 0x10000, scoped, tag = 'input window, operand 0']
    #allocation3 [shape = 's32[2]{0}', space=sflag, size = 0x8, scoped, tag = 'scoped memory for tpu_custom_call.1']
    #allocation4 [shape = 's32[2]{0}', space=sflag, size = 0x8, scoped, tag = 'scoped memory for tpu_custom_call.1']
    #allocation5 [shape = 'u8[131072]{0}', space=vmem, size = 0x20000, scoped, tag = 'input window, operand 1']
    #allocation6 [shape = 's32[2]{0}', space=sflag, size = 0x8, scoped, tag = 'scoped memory for tpu_custom_call.1']
    #allocation7 [shape = 'u8[131072]{0}', space=vmem, size = 0x20000, scoped, tag = 'input window, operand 2']
    #allocation8 [shape = 'u8[32768]{0}', space=vmem, size = 0x8000, scoped, tag = 'input window, operand 3']
    #allocation9 [shape = 's32[2]{0}', space=sflag, size = 0x8, scoped, tag = 'scoped memory for tpu_custom_call.1']
    #allocation10 [shape = 'u8[65536]{0}', space=vmem, size = 0x10000, scoped, tag = 'output window, operand 0']
    %9 = vsyncpa [#allocation3], 0
    %s10 = scalar_lea.sflag [#allocation3], 1
    %11 = vsyncpa %s10, 0
    %12 = vsyncpa [#allocation6], 0
    %s13 = scalar_lea.sflag [#allocation6], 1
    %14 = vsyncpa %s13, 0
    %15 = vsyncpa [#allocation9], 0
    %s16 = scalar_lea.sflag [#allocation9], 1
    %17 = vsyncpa %s16, 0
    %18 = vsyncpa [#allocation4], 0
    %s19 = scalar_lea.sflag [#allocation4], 1
    %20 = vsyncpa %s19, 0
    loop: start=0, step=1, limit=8
    $region2: #{tpu_custom_call.1} parent=1 // loop_pre_header
      _
    $region3: #{tpu_custom_call.1} parent=1 // loop_header
      %s22 = sphi 0, %s26
      %p23 = scmp.ge.s32.totalorder %s22, 8
      %s29 = sphi 0, %s41
      %s30 = sphi 0, %s37
      %s31 = sphi 0, %s29
      %s32 = sphi 0, %s30
      %s33 = sphi 0, %s31
      %s34 = sphi 0, %s32
      %s46 = sphi 0, %s48
      %s49 = sphi 0, %s46
      %s50 = sphi 0, %s49
      %s66 = sphi 0, %s50
      %s72 = sphi 0, %s74
      %s75 = sphi 0, %s72
      %s76 = sphi 0, %s75
      %s92 = sphi 0, %s76
      %s98 = sphi 0, %s100
      %s101 = sphi 0, %s98
      %s102 = sphi 0, %s101
      %s118 = sphi 0, %s102
      %s126 = sphi 0, %s128
      %s129 = sphi 0, %s126
      %s130 = sphi 0, %s129
      %s146 = sphi 0, %s130
      %s154 = sphi 0, %s156
      %s157 = sphi 0, %s154
      %s158 = sphi 0, %s157
      %s174 = sphi 0, %s158
    $region4: #{tpu_custom_call.1} parent=1 // loop_header_branch
      %25 = sbr.rel (%p23) target = $region8
    $region5: #{tpu_custom_call.1} parent=1 // loop_body
      %s27 = ssub.s32 %s22, 1
      %s28 = ssub.s32 %s22, 2
      %s35 = sadd.s32 1, %s30
      %p36 = scmp.ge.s32.totalorder %s35, 2
      %s37 = scalar_select %p36, 0, %s35
      %s38 = sadd.s32 1, %s29
      %s39 = scalar_select %p36, %s38, %s29
      %p40 = scmp.ge.s32.totalorder %s39, 3
      %s41 = scalar_select %p40, 0, %s39
      %s42 = ssub.s32 %s29, %s41
      %s43 = ssub.s32 %s30, %s37
      %s44 = sor.u32 %s42, %s43
      %p45 = scmp.eq.s32.totalorder %s44, 0
      %s47 = sadd.s32 %s46, 1
      %s48 = scalar_select %p45, %s46, %s47
      %p51 = pneg %p45
      %p52 = scmp.eq.s32.totalorder %s22, 5
      %p53 = por %p51, %p52
      %p54 = scmp.ne.s32.totalorder %s46, %s49
      %p55 = scmp.eq.s32.totalorder %s22, 0
      %p56 = por %p54, %p55
      %p57 = scmp.ne.s32.totalorder %s46, %s49
      %p58 = scmp.eq.s32.totalorder %s27, 5
      %p59 = por %p57, %p58
      %p60 = scmp.ne.s32.totalorder %s49, %s50
      %p61 = scmp.eq.s32.totalorder %s27, 0
      %p62 = por %p60, %p61
      %p63 = scmp.ne.s32.totalorder %s49, %s50
      %p64 = scmp.eq.s32.totalorder %s28, 5
      %p65 = por %p63, %p64
      %p67 = scmp.ne.s32.totalorder %s50, %s66
      %p68 = scmp.eq.s32.totalorder %s28, 0
      %p69 = por %p67, %p68
      %s70 = ssub.s32 %s29, %s41
      %p71 = scmp.eq.s32.totalorder %s70, 0
      %s73 = sadd.s32 %s72, 1
      %s74 = scalar_select %p71, %s72, %s73
      %p77 = pneg %p71
      %p78 = scmp.eq.s32.totalorder %s22, 5
      %p79 = por %p77, %p78
      %p80 = scmp.ne.s32.totalorder %s72, %s75
      %p81 = scmp.eq.s32.totalorder %s22, 0
      %p82 = por %p80, %p81
      %p83 = scmp.ne.s32.totalorder %s72, %s75
      %p84 = scmp.eq.s32.totalorder %s27, 5
      %p85 = por %p83, %p84
      %p86 = scmp.ne.s32.totalorder %s75, %s76
      %p87 = scmp.eq.s32.totalorder %s27, 0
      %p88 = por %p86, %p87
      %p89 = scmp.ne.s32.totalorder %s75, %s76
      %p90 = scmp.eq.s32.totalorder %s28, 5
      %p91 = por %p89, %p90
      %p93 = scmp.ne.s32.totalorder %s76, %s92
      %p94 = scmp.eq.s32.totalorder %s28, 0
      %p95 = por %p93, %p94
      %s96 = ssub.s32 %s29, %s41
      %p97 = scmp.eq.s32.totalorder %s96, 0
      %s99 = sadd.s32 %s98, 1
      %s100 = scalar_select %p97, %s98, %s99
      %p103 = pneg %p97
      %p104 = scmp.eq.s32.totalorder %s22, 5
      %p105 = por %p103, %p104
      %p106 = scmp.ne.s32.totalorder %s98, %s101
      %p107 = scmp.eq.s32.totalorder %s22, 0
      %p108 = por %p106, %p107
      %p109 = scmp.ne.s32.totalorder %s98, %s101
      %p110 = scmp.eq.s32.totalorder %s27, 5
      %p111 = por %p109, %p110
      %p112 = scmp.ne.s32.totalorder %s101, %s102
      %p113 = scmp.eq.s32.totalorder %s27, 0
      %p114 = por %p112, %p113
      %p115 = scmp.ne.s32.totalorder %s101, %s102
      %p116 = scmp.eq.s32.totalorder %s28, 5
      %p117 = por %p115, %p116
      %p119 = scmp.ne.s32.totalorder %s102, %s118
      %p120 = scmp.eq.s32.totalorder %s28, 0
      %p121 = por %p119, %p120
      %s122 = ssub.s32 %s29, %s41
      %s123 = ssub.s32 %s30, %s37
      %s124 = sor.u32 %s122, %s123
      %p125 = scmp.eq.s32.totalorder %s124, 0
      %s127 = sadd.s32 %s126, 1
      %s128 = scalar_select %p125, %s126, %s127
      %p131 = pneg %p125
      %p132 = scmp.eq.s32.totalorder %s22, 5
      %p133 = por %p131, %p132
      %p134 = scmp.ne.s32.totalorder %s126, %s129
      %p135 = scmp.eq.s32.totalorder %s22, 0
      %p136 = por %p134, %p135
      %p137 = scmp.ne.s32.totalorder %s126, %s129
      %p138 = scmp.eq.s32.totalorder %s27, 5
      %p139 = por %p137, %p138
      %p140 = scmp.ne.s32.totalorder %s129, %s130
      %p141 = scmp.eq.s32.totalorder %s27, 0
      %p142 = por %p140, %p141
      %p143 = scmp.ne.s32.totalorder %s129, %s130
      %p144 = scmp.eq.s32.totalorder %s28, 5
      %p145 = por %p143, %p144
      %p147 = scmp.ne.s32.totalorder %s130, %s146
      %p148 = scmp.eq.s32.totalorder %s28, 0
      %p149 = por %p147, %p148
      %s150 = ssub.s32 %s29, %s41
      %s151 = ssub.s32 %s30, %s37
      %s152 = sor.u32 %s150, %s151
      %p153 = scmp.eq.s32.totalorder %s152, 0
      %s155 = sadd.s32 %s154, 1
      %s156 = scalar_select %p153, %s154, %s155
      %p159 = pneg %p153
      %p160 = scmp.eq.s32.totalorder %s22, 5
      %p161 = por %p159, %p160
      %p162 = scmp.ne.s32.totalorder %s154, %s157
      %p163 = scmp.eq.s32.totalorder %s22, 0
      %p164 = por %p162, %p163
      %p165 = scmp.ne.s32.totalorder %s154, %s157
      %p166 = scmp.eq.s32.totalorder %s27, 5
      %p167 = por %p165, %p166
      %p168 = scmp.ne.s32.totalorder %s157, %s158
      %p169 = scmp.eq.s32.totalorder %s27, 0
      %p170 = por %p168, %p169
      %p171 = scmp.ne.s32.totalorder %s157, %s158
      %p172 = scmp.eq.s32.totalorder %s28, 5
      %p173 = por %p171, %p172
      %p175 = scmp.ne.s32.totalorder %s158, %s174
      %p176 = scmp.eq.s32.totalorder %s28, 0
      %p177 = por %p175, %p176
      %p178 = scmp.le.s32.totalorder 1, %s22
      %p179 = scmp.lt.s32.totalorder %s22, 7
      %p180 = pnand %p178, %p179
      %p181 = pneg %p180
      // Predicated region
      $region9: #{tpu_custom_call.1} parent=5 // pred_check
        _
      $region10: #{tpu_custom_call.1} parent=5 // pred_check_branch
        %183 = sbr.rel (%p180) target = $region12
      $region11: #{tpu_custom_call.1} parent=5 // pred_region
        %s184 = ssub.s32 %s22, 1
      $region12: #{tpu_custom_call.1} parent=5 // pred_fallthru
        _
      %p185 = scmp.lt.s32.totalorder %s22, 6
      // Predicated region
      $region13: #{tpu_custom_call.1} parent=5 // pred_check
        %p186 = pneg %p185
      $region14: #{tpu_custom_call.1} parent=5 // pred_check_branch
        %188 = sbr.rel (%p186) target = $region16
      $region15: #{tpu_custom_call.1} parent=5 // pred_region
        // Predicated region
        $region17: #{tpu_custom_call.1} parent=15 // pred_check
          %p189 = pneg %p56
        $region18: #{tpu_custom_call.1} parent=15 // pred_check_branch
          %191 = sbr.rel (%p189) target = $region20
        $region19: #{tpu_custom_call.1} parent=15 // pred_region
          %s192 = sand.u32 %s46, 1
          %s193 = scalar_lea.sflag [#allocation3], %s192
          %s194 = sand.u32 %s46, 1
          %s195 = smul.addr %s194, 64
          %s196 = scalar_lea.vmem [#allocation2], %s195
          %s197 = smul.u32 8, %s30
          %s199 = ssub.s32 1024, 1024
          %200 = vsyncadd %s193, %s199
          %s201 = smul.addr %s29, 16
          %s202 = sadd.s32 %s197, %s201
          %s203 = smul.addr %s202, 128
          %s204 = scalar_lea.hbm %s0, %s203
          %s205 = sshll.u32 %s196, 4
          %s206 = int_to_ptr.vmem [resolvable:$true] %s205
          %211 = dma.hbm_to_vmem [thread:$0]  %s204, 1024, %s206, %s193, 128, 128, 8
        $region20: #{tpu_custom_call.1} parent=15 // pred_fallthru
          _
        // Predicated region
        $region21: #{tpu_custom_call.1} parent=15 // pred_check
          %p212 = pneg %p82
        $region22: #{tpu_custom_call.1} parent=15 // pred_check_branch
          %214 = sbr.rel (%p212) target = $region24
        $region23: #{tpu_custom_call.1} parent=15 // pred_region
          %s215 = sand.u32 %s22, 1
          %s216 = scalar_lea.sflag [#allocation6], %s215
          %s217 = sand.u32 %s72, 1
          %s218 = smul.addr %s217, 128
          %s219 = scalar_lea.vmem [#allocation5], %s218
          %s221 = ssub.s32 2048, 2048
          %222 = vsyncadd %s216, %s221
          %s223 = smul.addr %s29, 16
          %s224 = smul.addr %s223, 128
          %s225 = scalar_lea.hbm %s1, %s224
          %s226 = sshll.u32 %s219, 4
          %s227 = int_to_ptr.vmem [resolvable:$true] %s226
          %232 = dma.hbm_to_vmem [thread:$0]  %s225, 2048, %s227, %s216, 128, 128, 8
        $region24: #{tpu_custom_call.1} parent=15 // pred_fallthru
          _
        // Predicated region
        $region25: #{tpu_custom_call.1} parent=15 // pred_check
          %p233 = pneg %p108
        $region26: #{tpu_custom_call.1} parent=15 // pred_check_branch
          %235 = sbr.rel (%p233) target = $region28
        $region27: #{tpu_custom_call.1} parent=15 // pred_region
          %s236 = sand.u32 %s22, 1
          %s237 = scalar_lea.sflag [#allocation6], %s236
          %s238 = sand.u32 %s98, 1
          %s239 = smul.addr %s238, 128
          %s240 = scalar_lea.vmem [#allocation7], %s239
          %s242 = ssub.s32 2048, 2048
          %243 = vsyncadd %s237, %s242
          %s244 = smul.addr %s29, 16
          %s245 = smul.addr %s244, 128
          %s246 = scalar_lea.hbm %s2, %s245
          %s247 = sshll.u32 %s240, 4
          %s248 = int_to_ptr.vmem [resolvable:$true] %s247
          %253 = dma.hbm_to_vmem [thread:$0]  %s246, 2048, %s248, %s237, 128, 128, 8
        $region28: #{tpu_custom_call.1} parent=15 // pred_fallthru
          _
        // Predicated region
        $region29: #{tpu_custom_call.1} parent=15 // pred_check
          %p254 = pneg %p136
        $region30: #{tpu_custom_call.1} parent=15 // pred_check_branch
          %256 = sbr.rel (%p254) target = $region32
        $region31: #{tpu_custom_call.1} parent=15 // pred_region
          %s257 = sand.u32 %s126, 1
          %s258 = scalar_lea.sflag [#allocation9], %s257
          %s259 = sand.u32 %s126, 1
          %s260 = smul.addr %s259, 32
          %s261 = scalar_lea.vmem [#allocation8], %s260
          %s262 = smul.u32 8, %s30
          %s264 = ssub.s32 512, 512
          %265 = vsyncadd %s258, %s264
          %s266 = smul.addr %s29, 16
          %s267 = sadd.s32 %s262, %s266
          %s268 = smul.addr %s267, 64
          %s269 = scalar_lea.hbm %s3, %s268
          %s270 = sshll.u32 %s261, 4
          %s271 = int_to_ptr.vmem [resolvable:$true] %s270
          %276 = dma.hbm_to_vmem [thread:$0]  %s269, 512, %s271, %s258, 64, 64, 4
        $region32: #{tpu_custom_call.1} parent=15 // pred_fallthru
          _
      $region16: #{tpu_custom_call.1} parent=5 // pred_fallthru
        _
      %p277 = scmp.le.s32.totalorder 1, %s22
      %p278 = scmp.lt.s32.totalorder %s22, 7
      %p279 = pnand %p277, %p278
      %p280 = pneg %p279
      // Predicated region
      $region33: #{tpu_custom_call.1} parent=5 // pred_check
        _
      $region34: #{tpu_custom_call.1} parent=5 // pred_check_branch
        %282 = sbr.rel (%p279) target = $region36
      $region35: #{tpu_custom_call.1} parent=5 // pred_region
        %s283 = ssub.s32 %s22, 1
        %s284 = sand.u32 %s49, 1
        %s285 = scalar_lea.sflag [#allocation3], %s284
        %s286 = sand.u32 %s49, 1
        %s287 = smul.addr %s286, 64
        %s288 = scalar_lea.vmem [#allocation2], %s287
        // Predicated region
        $region37: #{tpu_custom_call.1} parent=35 // pred_check
          %p289 = pneg %p62
        $region38: #{tpu_custom_call.1} parent=35 // pred_check_branch
          %291 = sbr.rel (%p289) target = $region40
        $region39: #{tpu_custom_call.1} parent=35 // pred_region
          %292 = dma.done %s285, 1024
        $region40: #{tpu_custom_call.1} parent=35 // pred_fallthru
          _
        %s293 = sand.u32 %s27, 1
        %s294 = scalar_lea.sflag [#allocation6], %s293
        %s295 = sand.u32 %s75, 1
        %s296 = smul.addr %s295, 128
        %s297 = scalar_lea.vmem [#allocation5], %s296
        // Predicated region
        $region41: #{tpu_custom_call.1} parent=35 // pred_check
          %p298 = pneg %p88
        $region42: #{tpu_custom_call.1} parent=35 // pred_check_branch
          %300 = sbr.rel (%p298) target = $region44
        $region43: #{tpu_custom_call.1} parent=35 // pred_region
          %301 = dma.done %s294, 2048
        $region44: #{tpu_custom_call.1} parent=35 // pred_fallthru
          _
        %s302 = sand.u32 %s27, 1
        %s303 = scalar_lea.sflag [#allocation6], %s302
        %s304 = sand.u32 %s101, 1
        %s305 = smul.addr %s304, 128
        %s306 = scalar_lea.vmem [#allocation7], %s305
        // Predicated region
        $region45: #{tpu_custom_call.1} parent=35 // pred_check
          %p307 = pneg %p114
        $region46: #{tpu_custom_call.1} parent=35 // pred_check_branch
          %309 = sbr.rel (%p307) target = $region48
        $region47: #{tpu_custom_call.1} parent=35 // pred_region
          %310 = dma.done %s303, 2048
        $region48: #{tpu_custom_call.1} parent=35 // pred_fallthru
          _
        %s311 = sand.u32 %s129, 1
        %s312 = scalar_lea.sflag [#allocation9], %s311
        %s313 = sand.u32 %s129, 1
        %s314 = smul.addr %s313, 32
        %s315 = scalar_lea.vmem [#allocation8], %s314
        // Predicated region
        $region49: #{tpu_custom_call.1} parent=35 // pred_check
          %p316 = pneg %p142
        $region50: #{tpu_custom_call.1} parent=35 // pred_check_branch
          %318 = sbr.rel (%p316) target = $region52
        $region51: #{tpu_custom_call.1} parent=35 // pred_region
          %319 = dma.done %s312, 512
        $region52: #{tpu_custom_call.1} parent=35 // pred_fallthru
          _
        %s320 = sand.u32 %s49, 1
        %s321 = scalar_lea.sflag [#allocation3], %s320
        %s322 = sand.u32 %s49, 1
        %s323 = smul.addr %s322, 64
        %s324 = scalar_lea.vmem [#allocation2], %s323
        %p325 = pneg %p62
        %p326 = pneg %p59
        %s327 = sand.u32 %s27, 1
        %s328 = scalar_lea.sflag [#allocation6], %s327
        %s329 = sand.u32 %s75, 1
        %s330 = smul.addr %s329, 128
        %s331 = scalar_lea.vmem [#allocation5], %s330
        %p332 = pneg %p88
        %p333 = pneg %p85
        %s334 = sand.u32 %s27, 1
        %s335 = scalar_lea.sflag [#allocation6], %s334
        %s336 = sand.u32 %s101, 1
        %s337 = smul.addr %s336, 128
        %s338 = scalar_lea.vmem [#allocation7], %s337
        %p339 = pneg %p114
        %p340 = pneg %p111
        %s341 = sand.u32 %s129, 1
        %s342 = scalar_lea.sflag [#allocation9], %s341
        %s343 = sand.u32 %s129, 1
        %s344 = smul.addr %s343, 32
        %s345 = scalar_lea.vmem [#allocation8], %s344
        %p346 = pneg %p142
        %p347 = pneg %p139
        %p348 = pneg %p170
        %p349 = pneg %p167
        %s350 = sand.u32 %s157, 1
        %s351 = scalar_lea.sflag [#allocation4], %s350
        %s352 = sand.u32 %s157, 1
        %s353 = smul.addr %s352, 64
        %s354 = scalar_lea.vmem [#allocation10], %s353
        %s355 = smul.u32 8, %s32
        %s356 = smul.u32 8, %s32
        %s357 = smul.u32 8, %s32
        %v358 = vld [vmem:[%s288] sm:$0xff]
        %v359 = vld [vmem:[%s288 + $0x8] sm:$0xff]
        %v360 = vld [vmem:[%s288 + $0x10] sm:$0xff]
        %v361 = vld [vmem:[%s288 + $0x18] sm:$0xff]
        %v362 = vld [vmem:[%s288 + $0x20] sm:$0xff]
        %v363 = vld [vmem:[%s288 + $0x28] sm:$0xff]
        %v364 = vld [vmem:[%s288 + $0x30] sm:$0xff]
        %v365 = vld [vmem:[%s288 + $0x38] sm:$0xff]
        %v366 = vmul.f32 %v358, 0.088388346
        %v367 = vmul.f32 %v359, 0.088388346
        %v368 = vmul.f32 %v360, 0.088388346
        %v369 = vmul.f32 %v361, 0.088388346
        %v370 = vmul.f32 %v362, 0.088388346
        %v371 = vmul.f32 %v363, 0.088388346
        %v372 = vmul.f32 %v364, 0.088388346
        %v373 = vmul.f32 %v365, 0.088388346
        %v374 = vld [vmem:[%s297] sm:$0xff]
        %v375 = vld [vmem:[%s297 + $0x8] sm:$0xff]
        %v376 = vld [vmem:[%s297 + $0x10] sm:$0xff]
        %v377 = vld [vmem:[%s297 + $0x18] sm:$0xff]
        %v378 = vld [vmem:[%s297 + $0x20] sm:$0xff]
        %v379 = vld [vmem:[%s297 + $0x28] sm:$0xff]
        %v380 = vld [vmem:[%s297 + $0x30] sm:$0xff]
        %v381 = vld [vmem:[%s297 + $0x38] sm:$0xff]
        %v382 = vld [vmem:[%s297 + $0x40] sm:$0xff]
        %v383 = vld [vmem:[%s297 + $0x48] sm:$0xff]
        %v384 = vld [vmem:[%s297 + $0x50] sm:$0xff]
        %v385 = vld [vmem:[%s297 + $0x58] sm:$0xff]
        %v386 = vld [vmem:[%s297 + $0x60] sm:$0xff]
        %v387 = vld [vmem:[%s297 + $0x68] sm:$0xff]
        %v388 = vld [vmem:[%s297 + $0x70] sm:$0xff]
        %v389 = vld [vmem:[%s297 + $0x78] sm:$0xff]
        %v390 = vld [vmem:[%s306] sm:$0xff]
        %v391 = vld [vmem:[%s306 + $0x8] sm:$0xff]
        %v392 = vld [vmem:[%s306 + $0x10] sm:$0xff]
        %v393 = vld [vmem:[%s306 + $0x18] sm:$0xff]
        %v394 = vld [vmem:[%s306 + $0x20] sm:$0xff]
        %v395 = vld [vmem:[%s306 + $0x28] sm:$0xff]
        %v396 = vld [vmem:[%s306 + $0x30] sm:$0xff]
        %v397 = vld [vmem:[%s306 + $0x38] sm:$0xff]
        %v398 = vld [vmem:[%s306 + $0x40] sm:$0xff]
        %v399 = vld [vmem:[%s306 + $0x48] sm:$0xff]
        %v400 = vld [vmem:[%s306 + $0x50] sm:$0xff]
        %v401 = vld [vmem:[%s306 + $0x58] sm:$0xff]
        %v402 = vld [vmem:[%s306 + $0x60] sm:$0xff]
        %v403 = vld [vmem:[%s306 + $0x68] sm:$0xff]
        %v404 = vld [vmem:[%s306 + $0x70] sm:$0xff]
        %v405 = vld [vmem:[%s306 + $0x78] sm:$0xff]
        %v406 = vld [vmem:[%s315] sm:$0xf]
        %v407 = vld [vmem:[%s315 + $0x4] sm:$0xf]
        %v408 = vld [vmem:[%s315 + $0x8] sm:$0xf]
        %v409 = vld [vmem:[%s315 + $0xc] sm:$0xf]
        %v410 = vld [vmem:[%s315 + $0x10] sm:$0xf]
        %v411 = vld [vmem:[%s315 + $0x14] sm:$0xf]
        %v412 = vld [vmem:[%s315 + $0x18] sm:$0xf]
        %v413 = vld [vmem:[%s315 + $0x1c] sm:$0xf]
        %v414 = vunpack.c.l.bf16 %v406
        %v415 = vunpack.c.l.bf16 %v407
        %v416 = vunpack.c.l.bf16 %v408
        %v417 = vunpack.c.l.bf16 %v409
        %v418 = vunpack.c.l.bf16 %v410
        %v419 = vunpack.c.l.bf16 %v411
        %v420 = vunpack.c.l.bf16 %v412
        %v421 = vunpack.c.l.bf16 %v413
        %422 = vmatprep.subr.mxu0 0.0
        %423 = vmatpush1.xpose.msra.mxu0 %v374
        %424 = vmatprep.subr.mxu0 0.0
        %425 = vmatpush1.xpose.msra.mxu0 %v375
        %426 = vmatprep.subr.mxu0 0.0
        %427 = vmatpush1.xpose.msra.mxu0 %v376
        %428 = vmatprep.subr.mxu0 0.0
        %429 = vmatpush1.xpose.msra.mxu0 %v377
        %430 = vmatprep.subr.mxu0 0.0
        %431 = vmatpush1.xpose.msra.mxu0 %v378
        %432 = vmatprep.subr.mxu0 0.0
        %433 = vmatpush1.xpose.msra.mxu0 %v379
        %434 = vmatprep.subr.mxu0 0.0
        %435 = vmatpush1.xpose.msra.mxu0 %v380
        %436 = vmatprep.subr.mxu0 0.0
        %437 = vmatpush1.xpose.msra.mxu0 %v381
        %438 = vmatprep.subr.mxu0 0.0
        %439 = vmatpush1.xpose.msra.mxu0 %v382
        %440 = vmatprep.subr.mxu0 0.0
        %441 = vmatpush1.xpose.msra.mxu0 %v383
        %442 = vmatprep.subr.mxu0 0.0
        %443 = vmatpush1.xpose.msra.mxu0 %v384
        %444 = vmatprep.subr.mxu0 0.0
        %445 = vmatpush1.xpose.msra.mxu0 %v385
        %446 = vmatprep.subr.mxu0 0.0
        %447 = vmatpush1.xpose.msra.mxu0 %v386
        %448 = vmatprep.subr.mxu0 0.0
        %449 = vmatpush1.xpose.msra.mxu0 %v387
        %450 = vmatprep.subr.mxu0 0.0
        %451 = vmatpush1.xpose.msra.mxu0 %v388
        %452 = vmatprep.subr.mxu0 0.0
        %453 = vmatpush1.xpose.msra.mxu0 %v389
        %454 = vmatprep.subr.mxu0 0.0
        %455 = vmatpush1.xpose.msra.mxu0 0.0
        %456 = vmatprep.subr.mxu0 0.0
        %457 = vmatpush1.xpose.msra.mxu0 0.0
        %458 = vmatprep.subr.mxu0 0.0
        %459 = vmatpush1.xpose.msra.mxu0 0.0
        %460 = vmatprep.subr.mxu0 0.0
        %461 = vmatpush1.xpose.msra.mxu0 0.0
        %462 = vmatprep.subr.mxu0 0.0
        %463 = vmatpush1.xpose.msra.mxu0 0.0
        %464 = vmatprep.subr.mxu0 0.0
        %465 = vmatpush1.xpose.msra.mxu0 0.0
        %466 = vmatprep.subr.mxu0 0.0
        %467 = vmatpush1.xpose.msra.mxu0 0.0
        %468 = vmatprep.subr.mxu0 0.0
        %469 = vmatpush1.xpose.msra.mxu0 0.0
        %470 = vmatprep.subr.mxu0 0.0
        %471 = vmatpush1.xpose.msra.mxu0 0.0
        %472 = vmatprep.subr.mxu0 0.0
        %473 = vmatpush1.xpose.msra.mxu0 0.0
        %474 = vmatprep.subr.mxu0 0.0
        %475 = vmatpush1.xpose.msra.mxu0 0.0
        %476 = vmatprep.subr.mxu0 0.0
        %477 = vmatpush1.xpose.msra.mxu0 0.0
        %478 = vmatprep.subr.mxu0 0.0
        %479 = vmatpush1.xpose.msra.mxu0 0.0
        %480 = vmatprep.subr.mxu0 0.0
        %481 = vmatpush1.xpose.msra.mxu0 0.0
        %482 = vmatprep.subr.mxu0 0.0
        %483 = vmatpush1.xpose.msra.mxu0 0.0
        %484 = vmatprep.subr.mxu0 0.0
        %485 = vmatpush1.xpose.msra.mxu0 0.0
        %486 = vmatprep.mubr.f32.mxu0 0.0
        %487 = vmatmul.mubr.f32.gmra.mrb[0].mxu0 %v366
        %v488 = vpop.f32.mrb[0].mxu0
        %v489 = vadd.f32 %v414, %v488
        %v490 = vpop.f32.mrb[0].mxu0
        %491 = vmatprep.mubr.f32.mxu0 0.0
        %492 = vmatmul.mubr.f32.gmra.mrb[0].mxu0 %v367
        %v493 = vpop.f32.mrb[0].mxu0
        %v494 = vadd.f32 %v415, %v493
        %v495 = vpop.f32.mrb[0].mxu0
        %496 = vmatprep.mubr.f32.mxu0 0.0
        %497 = vmatmul.mubr.f32.gmra.mrb[0].mxu0 %v368
        %v498 = vpop.f32.mrb[0].mxu0
        %v499 = vadd.f32 %v416, %v498
        %v500 = vpop.f32.mrb[0].mxu0
        %501 = vmatprep.mubr.f32.mxu0 0.0
        %502 = vmatmul.mubr.f32.gmra.mrb[0].mxu0 %v369
        %v503 = vpop.f32.mrb[0].mxu0
        %v504 = vadd.f32 %v417, %v503
        %v505 = vpop.f32.mrb[0].mxu0
        %506 = vmatprep.mubr.f32.mxu0 0.0
        %507 = vmatmul.mubr.f32.gmra.mrb[0].mxu0 %v370
        %v508 = vpop.f32.mrb[0].mxu0
        %v509 = vadd.f32 %v418, %v508
        %v510 = vpop.f32.mrb[0].mxu0
        %511 = vmatprep.mubr.f32.mxu0 0.0
        %512 = vmatmul.mubr.f32.gmra.mrb[0].mxu0 %v371
        %v513 = vpop.f32.mrb[0].mxu0
        %v514 = vadd.f32 %v419, %v513
        %v515 = vpop.f32.mrb[0].mxu0
        %516 = vmatprep.mubr.f32.mxu0 0.0
        %517 = vmatmul.mubr.f32.gmra.mrb[0].mxu0 %v372
        %v518 = vpop.f32.mrb[0].mxu0
        %v519 = vadd.f32 %v420, %v518
        %v520 = vpop.f32.mrb[0].mxu0
        %521 = vmatprep.mubr.f32.mxu0 0.0
        %522 = vmatmul.mubr.f32.gmra.mrb[0].mxu0 %v373
        %v523 = vpop.f32.mrb[0].mxu0
        %v524 = vadd.f32 %v421, %v523
        %v525 = vpop.f32.mrb[0].mxu0
        %526 = vdwg.mxu0
        %527 = vmax.xlane.f32.xlu0 %v489
        %v528 = vpop.xlane.xlu0 %527
        %529 = vmax.xlane.f32.xlu0 %v494
        %v530 = vpop.xlane.xlu0 %529
        %531 = vmax.xlane.f32.xlu0 %v499
        %v532 = vpop.xlane.xlu0 %531
        %533 = vmax.xlane.f32.xlu0 %v504
        %v534 = vpop.xlane.xlu0 %533
        %535 = vmax.xlane.f32.xlu0 %v509
        %v536 = vpop.xlane.xlu0 %535
        %537 = vmax.xlane.f32.xlu0 %v514
        %v538 = vpop.xlane.xlu0 %537
        %539 = vmax.xlane.f32.xlu0 %v519
        %v540 = vpop.xlane.xlu0 %539
        %541 = vmax.xlane.f32.xlu0 %v524
        %v542 = vpop.xlane.xlu0 %541
        %v543 = vsub.f32 %v489, %v528
        %v544 = vsub.f32 %v494, %v530
        %v545 = vsub.f32 %v499, %v532
        %v546 = vsub.f32 %v504, %v534
        %v547 = vsub.f32 %v509, %v536
        %v548 = vsub.f32 %v514, %v538
        %v549 = vsub.f32 %v519, %v540
        %v550 = vsub.f32 %v524, %v542
        %v551 = vmul.f32 %v543, 1.442695
        %v552 = vpow.pop %v551
        %v553 = vmul.f32 %v544, 1.442695
        %v554 = vpow.pop %v553
        %v555 = vmul.f32 %v545, 1.442695
        %v556 = vpow.pop %v555
        %v557 = vmul.f32 %v546, 1.442695
        %v558 = vpow.pop %v557
        %v559 = vmul.f32 %v547, 1.442695
        %v560 = vpow.pop %v559
        %v561 = vmul.f32 %v548, 1.442695
        %v562 = vpow.pop %v561
        %v563 = vmul.f32 %v549, 1.442695
        %v564 = vpow.pop %v563
        %v565 = vmul.f32 %v550, 1.442695
        %v566 = vpow.pop %v565
        %567 = vadd.xlane.f32.xlu0 %v552
        %v568 = vpop.xlane.xlu0 %567
        %569 = vadd.xlane.f32.xlu0 %v554
        %v570 = vpop.xlane.xlu0 %569
        %571 = vadd.xlane.f32.xlu0 %v556
        %v572 = vpop.xlane.xlu0 %571
        %573 = vadd.xlane.f32.xlu0 %v558
        %v574 = vpop.xlane.xlu0 %573
        %575 = vadd.xlane.f32.xlu0 %v560
        %v576 = vpop.xlane.xlu0 %575
        %577 = vadd.xlane.f32.xlu0 %v562
        %v578 = vpop.xlane.xlu0 %577
        %579 = vadd.xlane.f32.xlu0 %v564
        %v580 = vpop.xlane.xlu0 %579
        %581 = vadd.xlane.f32.xlu0 %v566
        %v582 = vpop.xlane.xlu0 %581
        %583 = vmatprep.subr.mxu0 0.0
        %584 = vmatpush1.msra.mxu0 %v390
        %585 = vmatprep.subr.mxu0 0.0
        %586 = vmatpush1.msra.mxu0 %v391
        %587 = vmatprep.subr.mxu0 0.0
        %588 = vmatpush1.msra.mxu0 %v392
        %589 = vmatprep.subr.mxu0 0.0
        %590 = vmatpush1.msra.mxu0 %v393
        %591 = vmatprep.subr.mxu0 0.0
        %592 = vmatpush1.msra.mxu0 %v394
        %593 = vmatprep.subr.mxu0 0.0
        %594 = vmatpush1.msra.mxu0 %v395
        %595 = vmatprep.subr.mxu0 0.0
        %596 = vmatpush1.msra.mxu0 %v396
        %597 = vmatprep.subr.mxu0 0.0
        %598 = vmatpush1.msra.mxu0 %v397
        %599 = vmatprep.subr.mxu0 0.0
        %600 = vmatpush1.msra.mxu0 %v398
        %601 = vmatprep.subr.mxu0 0.0
        %602 = vmatpush1.msra.mxu0 %v399
        %603 = vmatprep.subr.mxu0 0.0
        %604 = vmatpush1.msra.mxu0 %v400
        %605 = vmatprep.subr.mxu0 0.0
        %606 = vmatpush1.msra.mxu0 %v401
        %607 = vmatprep.subr.mxu0 0.0
        %608 = vmatpush1.msra.mxu0 %v402
        %609 = vmatprep.subr.mxu0 0.0
        %610 = vmatpush1.msra.mxu0 %v403
        %611 = vmatprep.subr.mxu0 0.0
        %612 = vmatpush1.msra.mxu0 %v404
        %613 = vmatprep.subr.mxu0 0.0
        %614 = vmatpush1.msra.mxu0 %v405
        %615 = vmatprep.subr.mxu0 0.0
        %616 = vmatpush1.msra.mxu0 0.0
        %617 = vmatprep.subr.mxu0 0.0
        %618 = vmatpush1.msra.mxu0 0.0
        %619 = vmatprep.subr.mxu0 0.0
        %620 = vmatpush1.msra.mxu0 0.0
        %621 = vmatprep.subr.mxu0 0.0
        %622 = vmatpush1.msra.mxu0 0.0
        %623 = vmatprep.subr.mxu0 0.0
        %624 = vmatpush1.msra.mxu0 0.0
        %625 = vmatprep.subr.mxu0 0.0
        %626 = vmatpush1.msra.mxu0 0.0
        %627 = vmatprep.subr.mxu0 0.0
        %628 = vmatpush1.msra.mxu0 0.0
        %629 = vmatprep.subr.mxu0 0.0
        %630 = vmatpush1.msra.mxu0 0.0
        %631 = vmatprep.subr.mxu0 0.0
        %632 = vmatpush1.msra.mxu0 0.0
        %633 = vmatprep.subr.mxu0 0.0
        %634 = vmatpush1.msra.mxu0 0.0
        %635 = vmatprep.subr.mxu0 0.0
        %636 = vmatpush1.msra.mxu0 0.0
        %637 = vmatprep.subr.mxu0 0.0
        %638 = vmatpush1.msra.mxu0 0.0
        %639 = vmatprep.subr.mxu0 0.0
        %640 = vmatpush1.msra.mxu0 0.0
        %641 = vmatprep.subr.mxu0 0.0
        %642 = vmatpush1.msra.mxu0 0.0
        %643 = vmatprep.subr.mxu0 0.0
        %644 = vmatpush1.msra.mxu0 0.0
        %645 = vmatprep.subr.mxu0 0.0
        %646 = vmatpush1.msra.mxu0 0.0
        %647 = vmatprep.mubr.f32.mxu0 0.0
        %648 = vmatmul.mubr.f32.gmra.mrb[0].mxu0 %v552
        %v649 = vpop.f32.mrb[0].mxu0
        %v650 = vadd.f32 0.0, %v649
        %v651 = vpop.f32.mrb[0].mxu0
        %652 = vmatprep.mubr.f32.mxu0 0.0
        %653 = vmatmul.mubr.f32.gmra.mrb[0].mxu0 %v554
        %v654 = vpop.f32.mrb[0].mxu0
        %v655 = vadd.f32 0.0, %v654
        %v656 = vpop.f32.mrb[0].mxu0
        %657 = vmatprep.mubr.f32.mxu0 0.0
        %658 = vmatmul.mubr.f32.gmra.mrb[0].mxu0 %v556
        %v659 = vpop.f32.mrb[0].mxu0
        %v660 = vadd.f32 0.0, %v659
        %v661 = vpop.f32.mrb[0].mxu0
        %662 = vmatprep.mubr.f32.mxu0 0.0
        %663 = vmatmul.mubr.f32.gmra.mrb[0].mxu0 %v558
        %v664 = vpop.f32.mrb[0].mxu0
        %v665 = vadd.f32 0.0, %v664
        %v666 = vpop.f32.mrb[0].mxu0
        %667 = vmatprep.mubr.f32.mxu0 0.0
        %668 = vmatmul.mubr.f32.gmra.mrb[0].mxu0 %v560
        %v669 = vpop.f32.mrb[0].mxu0
        %v670 = vadd.f32 0.0, %v669
        %v671 = vpop.f32.mrb[0].mxu0
        %672 = vmatprep.mubr.f32.mxu0 0.0
        %673 = vmatmul.mubr.f32.gmra.mrb[0].mxu0 %v562
        %v674 = vpop.f32.mrb[0].mxu0
        %v675 = vadd.f32 0.0, %v674
        %v676 = vpop.f32.mrb[0].mxu0
        %677 = vmatprep.mubr.f32.mxu0 0.0
        %678 = vmatmul.mubr.f32.gmra.mrb[0].mxu0 %v564
        %v679 = vpop.f32.mrb[0].mxu0
        %v680 = vadd.f32 0.0, %v679
        %v681 = vpop.f32.mrb[0].mxu0
        %682 = vmatprep.mubr.f32.mxu0 0.0
        %683 = vmatmul.mubr.f32.gmra.mrb[0].mxu0 %v566
        %v684 = vpop.f32.mrb[0].mxu0
        %v685 = vadd.f32 0.0, %v684
        %v686 = vpop.f32.mrb[0].mxu0
        %687 = vdwg.mxu0
        %v688 = vrcp.pop %v568
        %v689 = vrcp.pop %v570
        %v690 = vrcp.pop %v572
        %v691 = vrcp.pop %v574
        %v692 = vrcp.pop %v576
        %v693 = vrcp.pop %v578
        %v694 = vrcp.pop %v580
        %v695 = vrcp.pop %v582
        %v696 = vmul.f32 %v650, %v688
        %v697 = vmul.f32 %v655, %v689
        %v698 = vmul.f32 %v660, %v690
        %v699 = vmul.f32 %v665, %v691
        %v700 = vmul.f32 %v670, %v692
        %v701 = vmul.f32 %v675, %v693
        %v702 = vmul.f32 %v680, %v694
        %v703 = vmul.f32 %v685, %v695
        %704 = vst [vmem:[%s354] sm:$0xff] %v696
        %705 = vst [vmem:[%s354 + $0x8] sm:$0xff] %v697
        %706 = vst [vmem:[%s354 + $0x10] sm:$0xff] %v698
        %707 = vst [vmem:[%s354 + $0x18] sm:$0xff] %v699
        %708 = vst [vmem:[%s354 + $0x20] sm:$0xff] %v700
        %709 = vst [vmem:[%s354 + $0x28] sm:$0xff] %v701
        %710 = vst [vmem:[%s354 + $0x30] sm:$0xff] %v702
        %711 = vst [vmem:[%s354 + $0x38] sm:$0xff] %v703
        %s712 = sand.u32 %s157, 1
        %s713 = scalar_lea.sflag [#allocation4], %s712
        %s714 = sand.u32 %s157, 1
        %s715 = smul.addr %s714, 64
        %s716 = scalar_lea.vmem [#allocation10], %s715
        // Predicated region
        $region53: #{tpu_custom_call.1} parent=35 // pred_check
          %p717 = pneg %p167
        $region54: #{tpu_custom_call.1} parent=35 // pred_check_branch
          %719 = sbr.rel (%p717) target = $region56
        $region55: #{tpu_custom_call.1} parent=35 // pred_region
          %s720 = smul.u32 8, %s32
          %s722 = ssub.s32 1024, 1024
          %723 = vsyncadd %s713, %s722
          %s724 = smul.addr %s31, 16
          %s725 = sadd.s32 %s720, %s724
          %s726 = smul.addr %s725, 128
          %s727 = scalar_lea.hbm %s4, %s726
          %s728 = sshll.u32 %s716, 4
          %s729 = int_to_ptr.vmem [resolvable:$true] %s728
          %734 = dma.vmem_to_hbm [thread:$0]  %s729, 1024, %s727, %s713, 128, 128, 8
        $region56: #{tpu_custom_call.1} parent=35 // pred_fallthru
          _
      $region36: #{tpu_custom_call.1} parent=5 // pred_fallthru
        _
      %p735 = scmp.le.s32.totalorder 2, %s22
      // Predicated region
      $region57: #{tpu_custom_call.1} parent=5 // pred_check
        %p736 = pneg %p735
      $region58: #{tpu_custom_call.1} parent=5 // pred_check_branch
        %738 = sbr.rel (%p736) target = $region60
      $region59: #{tpu_custom_call.1} parent=5 // pred_region
        %s739 = ssub.s32 %s22, 2
        // Predicated region
        $region61: #{tpu_custom_call.1} parent=59 // pred_check
          %p740 = pneg %p173
        $region62: #{tpu_custom_call.1} parent=59 // pred_check_branch
          %742 = sbr.rel (%p740) target = $region64
        $region63: #{tpu_custom_call.1} parent=59 // pred_region
          %s743 = sand.u32 %s158, 1
          %s744 = scalar_lea.sflag [#allocation4], %s743
          %s745 = sand.u32 %s158, 1
          %s746 = smul.addr %s745, 64
          %s747 = scalar_lea.vmem [#allocation10], %s746
          %748 = dma.done %s744, 1024
        $region64: #{tpu_custom_call.1} parent=59 // pred_fallthru
          _
      $region60: #{tpu_custom_call.1} parent=5 // pred_fallthru
        _
    $region6: #{tpu_custom_call.1} parent=1 // loop_footer
      %s26 = sadd.s32 1, %s22
    $region7: #{tpu_custom_call.1} parent=1 // loop_footer_branch
      %21 = sbr.rel target = $region3
    $region8: #{tpu_custom_call.1} parent=1 // loop_exit
      _
    %749 = vsyncpa [#allocation3], 1
    %s750 = scalar_lea.sflag [#allocation3], 1
    %751 = vsyncpa %s750, 1
    %752 = vsyncpa [#allocation6], 1
    %s753 = scalar_lea.sflag [#allocation6], 1
    %754 = vsyncpa %s753, 1
    %755 = vsyncpa [#allocation9], 1
    %s756 = scalar_lea.sflag [#allocation9], 1
    %757 = vsyncpa %s756, 1
    %758 = vsyncpa [#allocation4], 1
    %s759 = scalar_lea.sflag [#allocation4], 1
    %760 = vsyncpa %s759, 1

</llo_original>
